<compile_context>
chip_gen: v7x
topology: tpu7x:2x2x1
jax: 0.10.0
libtpu: 0.0.40
codegen_flags: <defaults>
</compile_context>

<pallas_src>
import math

import jax
import jax.numpy as jnp
from jax.experimental import pallas as pl
from jax.experimental.pallas import tpu as pltpu


# ----------------------------- kernel ---------------------------------------

def _actnorm_affine_kernel(x_ref, scale_ref, shift_ref, o_ref):
    # (tb, tn) tile: pure VPU elementwise, params broadcast along sublanes.
    x = x_ref[...].astype(jnp.float32)
    o_ref[...] = (x * scale_ref[...] + shift_ref[...]).astype(o_ref.dtype)


# ----------------------------- tiling helpers --------------------------------

def _cdiv(a, b):
    return -(-a // b)


def _round_up(a, m):
    return _cdiv(a, m) * m


def _sublane_multiple(dtype):
    # f32 -> 8, bf16 -> 16, int8/fp8 -> 32 (packed-sublane alignment).
    return max(8, 32 // jnp.dtype(dtype).itemsize)


def _device_budget():
    """(vmem_cap_bytes, num_tensorcores) for the current TPU generation."""
    try:
        kind = jax.devices()[0].device_kind.lower()
    except Exception:  # pragma: no cover - defensive
        kind = ""
    if "v7" in kind:
        return 48 << 20, 2          # 64 MiB physical / TC: leave headroom
    if "v6" in kind or "v5" in kind:
        return 96 << 20, 1          # 128 MiB physical
    return 48 << 20, 1              # conservative default (v4 / unknown)


def _lane_fold_factor(batch, d):
    """Fold k batch rows into the lane dim so the last dim is a multiple of 128."""
    if d % 128 == 0:
        return 1
    k = 128 // math.gcd(d, 128)
    if k > 1 and batch % k == 0:
        return k
    return 1


def _pick_tiles(B, D, itemsize, sub, vmem_cap, num_cores, target_bytes=4 << 20):
    """Byte-targeted (tb, tn) tile.  tb is sublane-aligned (or the full batch),
    tn is the full feature dim unless D is a huge multiple of 128."""
    # Feature tile: only split when even a `sub`-row strip exceeds the target.
    if D % 128 == 0 and D * itemsize * sub > target_bytes:
        tn = max(128, ((target_bytes // (itemsize * sub)) // 128) * 128)
        tn = min(tn, D)
    else:
        tn = D

    # Batch tile targeted by bytes (memory-bound kernel: bigger is better).
    tb = target_bytes // (tn * itemsize)
    tb = max(sub, (tb // sub) * sub)
    if tb >= B:
        tb = B                      # full-dim block is always legal

    # Fit double-buffered in + out tiles (+ resident params) in the VMEM budget.
    def _vmem_bytes(t):
        return 4 * t * tn * itemsize + 4 * tn * 4 + (1 << 20)

    while tb > sub and _vmem_bytes(tb) > vmem_cap:
        tb = max(sub, ((tb // 2) // sub) * sub)

    # Balance the batch blocks; on multi-TC parts keep >= 2 steps per core.
    if tb < B:
        nb = _cdiv(B, tb)
        if num_cores > 1 and nb < 2 * num_cores and B >= 2 * num_cores * sub:
            nb = 2 * num_cores
        tb_bal = _round_up(_cdiv(B, nb), sub)
        tb = max(sub, min(tb, tb_bal))

    return tb, tn


# ----------------------------- wrapper ---------------------------------------

def actnorm_apply(x, weight, bias, mode="direct"):
    """Pallas-accelerated ActNorm forward.  Returns (y, logdet) matching the
    PyTorch module's semantics for the given mode (logdet stays in float32)."""
    B, D = x.shape
    assert weight.shape == (D,) and bias.shape == (D,)

    w32 = weight.astype(jnp.float32)
    b32 = bias.astype(jnp.float32)

    # Hoist the transcendental + fold bias: both modes become y = x*scale + shift.
    if mode == "direct":
        scale = jnp.exp(w32)
        shift = -b32 * scale
        logdet_scalar = jnp.sum(w32)
    else:
        scale = jnp.exp(-w32)
        shift = b32
        logdet_scalar = -jnp.sum(w32)

    # Lane-dense fold: (B, D) -> (B/k, k*D) with k*D % 128 == 0 when possible.
    k = _lane_fold_factor(B, D)
    B_eff, D_eff = B // k, D * k
    x_eff = x.reshape(B_eff, D_eff)
    scale_eff = jnp.tile(scale, k).reshape(1, D_eff)
    shift_eff = jnp.tile(shift, k).reshape(1, D_eff)

    itemsize = jnp.dtype(x.dtype).itemsize
    sub = _sublane_multiple(x.dtype)
    vmem_cap, num_cores = _device_budget()
    tb, tn = _pick_tiles(B_eff, D_eff, itemsize, sub, vmem_cap, num_cores)

    grid = (_cdiv(B_eff, tb), _cdiv(D_eff, tn))

    cost = pl.CostEstimate(
        flops=2 * B * D,                                   # fused mul + add
        transcendentals=0,                                 # exp hoisted to wrapper
        bytes_accessed=2 * B * D * itemsize + 2 * D * 4,
    )

    vmem_needed = 4 * tb * tn * itemsize + 4 * tn * 4
    vmem_limit = min(vmem_cap, max(32 << 20, int(vmem_needed * 1.5)))

    y_eff = pl.pallas_call(
        _actnorm_affine_kernel,
        out_shape=jax.ShapeDtypeStruct((B_eff, D_eff), x.dtype),
        grid_spec=pltpu.PrefetchScalarGridSpec(
            num_scalar_prefetch=0,
            grid=grid,
            in_specs=[
                pl.BlockSpec((tb, tn), lambda i, j: (i, j)),   # x tile
                pl.BlockSpec((1, tn), lambda i, j: (0, j)),    # scale (resident)
                pl.BlockSpec((1, tn), lambda i, j: (0, j)),    # shift (resident)
            ],
            out_specs=pl.BlockSpec((tb, tn), lambda i, j: (i, j)),
        ),
        compiler_params=pltpu.CompilerParams(
            dimension_semantics=("parallel", "parallel"),
            vmem_limit_bytes=vmem_limit,
        ),
        cost_estimate=cost,
    )(x_eff, scale_eff, shift_eff)

    y = y_eff.reshape(B, D)
    logdet = jnp.broadcast_to(logdet_scalar.reshape(1, 1), (B, 1))   # float32
    return y, logdet


def actnorm_init(inputs, eps=1e-12):
    """Data-dependent init (the `initialized == False` branch of the module):
    weight = log(1 / (std(x, 0) + eps)),  bias = mean(x, 0).
    One-time stateful init -> plain JAX glue, not a kernel."""
    # torch.Tensor.std defaults to the unbiased estimator (ddof=1).
    x32 = inputs.astype(jnp.float32)
    std = jnp.std(x32, axis=0, ddof=1)
    weight = jnp.log(1.0 / (std + eps))
    bias = jnp.mean(x32, axis=0)
    return weight, bias


# ----------------------------- demo / check ----------------------------------

if __name__ == "__main__":
    key = jax.random.PRNGKey(0)
    batch, num_inputs = 16, 32          # small demo shape (flat feature vectors)

    x = jax.random.normal(key, (batch, num_inputs), dtype=jnp.float32) * 2.0 + 0.5

    # One-time data-dependent initialization (as in the PyTorch module).
    weight, bias = actnorm_init(x)

    # Direct pass through the Pallas kernel (lane-dense fold: (16,32)->(4,128)).
    y, logdet = actnorm_apply(x, weight, bias, mode="direct")
    y = jax.block_until_ready(y)
    logdet = jax.block_until_ready(logdet)

    # Inverse pass (roundtrip) through the Pallas kernel.
    x_rec, logdet_inv = actnorm_apply(y, weight, bias, mode="inverse")
    x_rec = jax.block_until_ready(x_rec)

    # Pure-JAX reference.
    y_ref = (x - bias[None, :]) * jnp.exp(weight)[None, :]
    ld_ref = jnp.broadcast_to(jnp.sum(weight).reshape(1, 1), (batch, 1))

    assert y.shape == (batch, num_inputs)
    assert logdet.shape == (batch, 1)
    assert jnp.allclose(y, y_ref, atol=1e-5, rtol=1e-5)
    assert jnp.allclose(logdet, ld_ref, atol=1e-5, rtol=1e-5)
    assert jnp.allclose(logdet_inv, -ld_ref, atol=1e-5, rtol=1e-5)
    assert jnp.allclose(x_rec, x, atol=1e-4, rtol=1e-4)   # roundtrip

    print("KERNEL_OK")
</pallas_src>

<mosaic_0001>
module attributes {stable_mosaic.version = 11 : i64} {
  func.func @_actnorm_affine_kernel(%arg0: i32, %arg1: i32, %arg2: memref<4x128xf32, #tpu.memory_space<vmem>>, %arg3: memref<1x128xf32, #tpu.memory_space<vmem>>, %arg4: memref<1x128xf32, #tpu.memory_space<vmem>>, %arg5: memref<4x128xf32, #tpu.memory_space<vmem>>) attributes {dimension_semantics = [#tpu.dimension_semantics<parallel>, #tpu.dimension_semantics<parallel>], iteration_bounds = array<i64: 1, 1>, scalar_prefetch = 0 : i64, scratch_operands = 0 : i64, tpu.core_type = #tpu.core_type<tc>, window_params = [{transform_indices = @transform_0, window_bounds = array<i64: 4, 128>}, {transform_indices = @transform_1, window_bounds = array<i64: 1, 128>}, {transform_indices = @transform_2, window_bounds = array<i64: 1, 128>}, {transform_indices = @transform_3, window_bounds = array<i64: 4, 128>}]} {
    %c0 = arith.constant 0 : index
    %c0_0 = arith.constant 0 : index
    %0 = vector.load %arg2[%c0, %c0_0] : memref<4x128xf32, #tpu.memory_space<vmem>>, vector<4x128xf32>
    %c0_1 = arith.constant 0 : index
    %c0_2 = arith.constant 0 : index
    %1 = vector.load %arg3[%c0_1, %c0_2] : memref<1x128xf32, #tpu.memory_space<vmem>>, vector<1x128xf32>
    %2 = vector.broadcast %1 : vector<1x128xf32> to vector<4x128xf32>
    %3 = arith.mulf %0, %2 : vector<4x128xf32>
    %c0_3 = arith.constant 0 : index
    %c0_4 = arith.constant 0 : index
    %4 = vector.load %arg4[%c0_3, %c0_4] : memref<1x128xf32, #tpu.memory_space<vmem>>, vector<1x128xf32>
    %5 = vector.broadcast %4 : vector<1x128xf32> to vector<4x128xf32>
    %6 = arith.addf %3, %5 : vector<4x128xf32>
    %c0_5 = arith.constant 0 : index
    %c0_6 = arith.constant 0 : index
    %7 = vector.load %arg5[%c0_5, %c0_6] : memref<4x128xf32, #tpu.memory_space<vmem>>, vector<4x128xf32>
    tpu.vector_store %arg5[%c0_5, %c0_6], %6 {strides = array<i32>} : memref<4x128xf32, #tpu.memory_space<vmem>>, vector<4x128xf32>,
    return
  }
  func.func @transform_0(%arg0: i32, %arg1: i32) -> (i32, i32) {
    %c0_i32 = arith.constant 0 : i32
    return %arg0, %arg1 : i32, i32
  }
  func.func @transform_1(%arg0: i32, %arg1: i32) -> (i32, i32) {
    %c0_i32 = arith.constant 0 : i32
    %c0_i32_0 = arith.constant 0 : i32
    return %c0_i32, %arg1 : i32, i32
  }
  func.func @transform_2(%arg0: i32, %arg1: i32) -> (i32, i32) {
    %c0_i32 = arith.constant 0 : i32
    %c0_i32_0 = arith.constant 0 : i32
    return %c0_i32, %arg1 : i32, i32
  }
  func.func @transform_3(%arg0: i32, %arg1: i32) -> (i32, i32) {
    %c0_i32 = arith.constant 0 : i32
    return %arg0, %arg1 : i32, i32
  }
}

</mosaic_0001>

<llo_original>
// kernel: tpu_custom_call.1
$region0: #{tpu_custom_call.1}
  #allocation0 [shape = 'u32[]', space=smem, size = 0x4, offset = 0x4, fixed_abs, tag = 'smem constant byte address 0x4 - core index']
  #allocation1 [shape = 'u32[144,128]{1,0:T(1,128)}', space=vmem, size = 0x12000, scoped, tag = 'internal scratch']
  %s0 = inlined_call_operand.hbm [shape: f32[4,128], index: 0, kind: input, shape index: {}]
  %s1 = inlined_call_operand.vmem [shape: f32[1,128], index: 1, kind: input, shape index: {}]
  %s2 = inlined_call_operand.vmem [shape: f32[1,128], index: 2, kind: input, shape index: {}]
  %s3 = inlined_call_operand.hbm [shape: f32[4,128], index: 3, kind: output, shape index: {}]
  %s4 = sld [smem:[#allocation0]]
  $region26: #{tpu_custom_call.1} parent=0
    _
  %s6 = ssub.s32 1, %s4
  %s7 = scalar_select 0, %s6, %s4
  $region1: #{tpu_custom_call.1} parent=0
    #allocation2 [shape = 'u8[2048]{0}', space=vmem, size = 0x800, scoped, tag = 'input window, operand 0, single buffered']
    #allocation3 [shape = 's32[1]{0}', space=sflag, size = 0x4, scoped, tag = 'scoped memory for tpu_custom_call.1']
    #allocation4 [shape = 's32[1]{0}', space=sflag, size = 0x4, scoped, tag = 'scoped memory for tpu_custom_call.1']
    #allocation5 [shape = 'u8[2048]{0}', space=vmem, size = 0x800, scoped, tag = 'output window, operand 0, single buffered']
    %8 = vsyncpa [#allocation3], 0
    %9 = vsyncpa [#allocation4], 0
    // Predicated region
    $region2: #{tpu_custom_call.1} parent=1 // pred_check
      _
    $region3: #{tpu_custom_call.1} parent=1 // pred_check_branch
      %11 = sbr.rel (0) target = $region5
    $region4: #{tpu_custom_call.1} parent=1 // pred_region
      %s13 = ssub.s32 64, 64
      %14 = vsyncadd [#allocation3], %s13
      %s16 = sshll.u32 [#allocation2], 4
      %s17 = int_to_ptr.vmem [resolvable:$true] %s16
      %19 = dma.hbm_to_vmem [thread:$0]  %s0, 64, %s17, [#allocation3]
    $region5: #{tpu_custom_call.1} parent=1 // pred_fallthru
      _
    // Predicated region
    $region6: #{tpu_custom_call.1} parent=1 // pred_check
      _
    $region7: #{tpu_custom_call.1} parent=1 // pred_check_branch
      %21 = sbr.rel (0) target = $region9
    $region8: #{tpu_custom_call.1} parent=1 // pred_region
      _
    $region9: #{tpu_custom_call.1} parent=1 // pred_fallthru
      _
    // Predicated region
    $region10: #{tpu_custom_call.1} parent=1 // pred_check
      _
    $region11: #{tpu_custom_call.1} parent=1 // pred_check_branch
      %23 = sbr.rel (0) target = $region13
    $region12: #{tpu_custom_call.1} parent=1 // pred_region
      _
    $region13: #{tpu_custom_call.1} parent=1 // pred_fallthru
      _
    // Predicated region
    $region14: #{tpu_custom_call.1} parent=1 // pred_check
      _
    $region15: #{tpu_custom_call.1} parent=1 // pred_check_branch
      %25 = sbr.rel (0) target = $region17
    $region16: #{tpu_custom_call.1} parent=1 // pred_region
      %26 = dma.done [#allocation3], 64
    $region17: #{tpu_custom_call.1} parent=1 // pred_fallthru
      _
    %v27 = vld [vmem:[#allocation2] sm:$0xf]
    %v28 = vld [vmem:[%s1] sm:$0x1]
    %v30 = vlaneseq
    %v31 = vshrl.u32 %v30, 7
    %v32 = vsub.s32 0, %v31
    %v33 = vrot.slane %v28, %v32
    %v35 = vmul.f32 %v27, %v33
    %v36 = vld [vmem:[%s2] sm:$0x1]
    %v38 = vlaneseq
    %v39 = vshrl.u32 %v38, 7
    %v40 = vsub.s32 0, %v39
    %v41 = vrot.slane %v36, %v40
    %v43 = vadd.f32 %v35, %v41
    %44 = vst [vmem:[#allocation5] sm:$0xf] %v43
    // Predicated region
    $region18: #{tpu_custom_call.1} parent=1 // pred_check
      _
    $region19: #{tpu_custom_call.1} parent=1 // pred_check_branch
      %46 = sbr.rel (0) target = $region21
    $region20: #{tpu_custom_call.1} parent=1 // pred_region
      %s48 = ssub.s32 64, 64
      %49 = vsyncadd [#allocation4], %s48
      %s51 = sshll.u32 [#allocation5], 4
      %s52 = int_to_ptr.vmem [resolvable:$true] %s51
      %54 = dma.vmem_to_hbm [thread:$0]  %s52, 64, %s3, [#allocation4]
    $region21: #{tpu_custom_call.1} parent=1 // pred_fallthru
      _
    // Predicated region
    $region22: #{tpu_custom_call.1} parent=1 // pred_check
      _
    $region23: #{tpu_custom_call.1} parent=1 // pred_check_branch
      %56 = sbr.rel (0) target = $region25
    $region24: #{tpu_custom_call.1} parent=1 // pred_region
      %57 = dma.done [#allocation4], 64
    $region25: #{tpu_custom_call.1} parent=1 // pred_fallthru
      _
    %58 = vsyncpa [#allocation3], 1
    %59 = vsyncpa [#allocation4], 1

</llo_original>
